<compile_context>
chip_gen: v5e
topology: v5e:2x2
jax: 0.10.0
libtpu: 0.0.40
codegen_flags: <defaults>
</compile_context>

<pallas_src>
import functools

import jax
import jax.numpy as jnp
from jax.experimental import pallas as pl
from jax.experimental.pallas import tpu as pltpu

BN_EPS = 1e-5


def _inverted_residual_kernel(x_ref, w1_ref, b1_ref, w2_ref, b2_ref, o_ref):
    # x_ref:  (1, C_in, t_hw)   pixel tile, lane-dense pixels
    # w1_ref: (hidden, C_in)    conv1 weight with BN1 folded in (resident, constant index_map)
    # b1_ref: (hidden, 1)       conv1 bias with BN1 folded in
    # w2_ref: (C_out, hidden)   conv2 weight with BN2 folded in
    # b2_ref: (C_out, 1)        BN2 shift (conv2 has no bias)
    # o_ref:  (1, C_out, t_hw)
    x = x_ref[0]

    # 1x1 conv (+ folded BN1): (hidden, C_in) @ (C_in, t_hw) -> (hidden, t_hw), f32 accumulate.
    h = jnp.dot(w1_ref[...], x, preferred_element_type=jnp.float32)
    h = h + b1_ref[...].astype(jnp.float32)
    # ReLU6 (f32 epilogue; keep elementwise in f32 for v5e's VPU)
    h = jnp.clip(h, 0.0, 6.0)

    # 1x1 conv (+ folded BN2): (C_out, hidden) @ (hidden, t_hw) -> (C_out, t_hw), f32 accumulate.
    y = jnp.dot(w2_ref[...], h.astype(w2_ref.dtype), preferred_element_type=jnp.float32)
    y = y + b2_ref[...].astype(jnp.float32)
    # ReLU
    y = jnp.maximum(y, 0.0)

    o_ref[0] = y.astype(o_ref.dtype)


@functools.partial(jax.jit, static_argnames=("tile_hw",))
def inverted_residual_forward(x_nchw, params, tile_hw=1024):
    """Run the InvertedResidual forward pass (inference-mode BN folded into the convs).

    x_nchw: (N, C_in, H, W)
    params: dict with w1 (hidden, C_in), b1 (hidden,), w2 (C_out, hidden), b2 (C_out,)
    """
    w1, b1, w2, b2 = params["w1"], params["b1"], params["w2"], params["b2"]
    N, C_in, H, W = x_nchw.shape
    hidden = w1.shape[0]
    C_out = w2.shape[0]
    HW = H * W

    # NCHW -> (N, C_in, H*W): pure reshape (contiguous), no transpose / extra HBM pass.
    x = x_nchw.reshape(N, C_in, HW)

    # Lane-dense pixel tile (multiple of 128 when HW is large); full HW for small inputs.
    t_hw = min(tile_hw, HW)
    grid = (N, pl.cdiv(HW, t_hw))

    b1_2d = b1.reshape(hidden, 1)
    b2_2d = b2.reshape(C_out, 1)

    out = pl.pallas_call(
        _inverted_residual_kernel,
        out_shape=jax.ShapeDtypeStruct((N, C_out, HW), x_nchw.dtype),
        grid_spec=pltpu.PrefetchScalarGridSpec(
            num_scalar_prefetch=0,
            grid=grid,
            in_specs=[
                pl.BlockSpec((1, C_in, t_hw), lambda n, j: (n, 0, j)),
                pl.BlockSpec((hidden, C_in), lambda n, j: (0, 0)),
                pl.BlockSpec((hidden, 1), lambda n, j: (0, 0)),
                pl.BlockSpec((C_out, hidden), lambda n, j: (0, 0)),
                pl.BlockSpec((C_out, 1), lambda n, j: (0, 0)),
            ],
            out_specs=pl.BlockSpec((1, C_out, t_hw), lambda n, j: (n, 0, j)),
        ),
        compiler_params=pltpu.CompilerParams(
            dimension_semantics=("parallel", "parallel"),
            # Headroom for large pixel tiles / large hidden dims; safe on v5e (128 MiB),
            # v6e (128 MiB) and v7x (64 MiB physical).
            vmem_limit_bytes=32 * 1024 * 1024,
        ),
    )(x, w1, b1_2d, w2, b2_2d)

    # (N, C_out, H*W) -> (N, C_out, H, W): free reshape, no transpose.
    return out.reshape(N, C_out, H, W)


def make_params(key, in_channels, hidden_dim, out_channels, param_dtype=jnp.float32):
    """Deterministic synthetic parameters, with BN folded into the convs (eval mode).

    Weights are produced in the "weights-on-left" orientation used by the kernel:
      w1: (hidden, C_in), w2: (C_out, hidden).
    On v6e/v7x, pass param_dtype=jnp.bfloat16 (and cast x to bf16) to halve HBM traffic;
    accumulation stays in f32 inside the kernel.
    """
    ks = jax.random.split(key, 11)

    # conv1: 1x1, bias=True  -> weight (hidden, in), bias (hidden,)
    conv1_w = jax.random.normal(ks[0], (hidden_dim, in_channels), jnp.float32) * 0.1
    conv1_b = jax.random.normal(ks[1], (hidden_dim,), jnp.float32) * 0.1
    # BN1 parameters / running stats
    bn1_gamma = 1.0 + 0.1 * jax.random.normal(ks[2], (hidden_dim,), jnp.float32)
    bn1_beta = 0.1 * jax.random.normal(ks[3], (hidden_dim,), jnp.float32)
    bn1_mean = 0.1 * jax.random.normal(ks[4], (hidden_dim,), jnp.float32)
    bn1_var = jnp.abs(jax.random.normal(ks[5], (hidden_dim,), jnp.float32)) + 0.5

    # conv2: 1x1, bias=False -> weight (out, hidden)
    conv2_w = jax.random.normal(ks[6], (out_channels, hidden_dim), jnp.float32) * 0.1
    # BN2
    bn2_gamma = 1.0 + 0.1 * jax.random.normal(ks[7], (out_channels,), jnp.float32)
    bn2_beta = 0.1 * jax.random.normal(ks[8], (out_channels,), jnp.float32)
    bn2_mean = 0.1 * jax.random.normal(ks[9], (out_channels,), jnp.float32)
    bn2_var = jnp.abs(jax.random.normal(ks[10], (out_channels,), jnp.float32)) + 0.5

    # Fold BN1 into conv1:  y = s1 * (conv1(x)) + (beta1 - s1*mean1), s1 = gamma1/sqrt(var1+eps)
    s1 = bn1_gamma / jnp.sqrt(bn1_var + BN_EPS)
    w1 = conv1_w * s1[:, None]                    # (hidden, C_in)
    b1 = s1 * (conv1_b - bn1_mean) + bn1_beta     # (hidden,)

    # Fold BN2 into conv2 (no conv bias)
    s2 = bn2_gamma / jnp.sqrt(bn2_var + BN_EPS)
    w2 = conv2_w * s2[:, None]                    # (C_out, hidden)
    b2 = bn2_beta - s2 * bn2_mean                 # (C_out,)

    return {
        "w1": w1.astype(param_dtype),
        "b1": b1.astype(jnp.float32),
        "w2": w2.astype(param_dtype),
        "b2": b2.astype(jnp.float32),
    }


def reference_forward(x_nchw, params):
    """Pure-JAX reference for correctness check (NCHW-native, f32)."""
    w1 = params["w1"].astype(jnp.float32)   # (hidden, C_in)
    w2 = params["w2"].astype(jnp.float32)   # (C_out, hidden)
    b1 = params["b1"]
    b2 = params["b2"]
    x = x_nchw.astype(jnp.float32)
    h = jnp.einsum("ec,ncxy->nexy", w1, x) + b1[None, :, None, None]
    h = jnp.clip(h, 0.0, 6.0)
    y = jnp.einsum("oe,nexy->noxy", w2, h) + b2[None, :, None, None]
    return jnp.maximum(y, 0.0)


if __name__ == "__main__":
    key = jax.random.PRNGKey(0)
    k_x, k_p = jax.random.split(key)

    in_channels, hidden_dim, out_channels = 4, 32, 3
    N, H, W = 2, 16, 16

    x = jax.random.normal(k_x, (N, in_channels, H, W), jnp.float32)
    params = make_params(k_p, in_channels, hidden_dim, out_channels)

    out = inverted_residual_forward(x, params)
    out = jax.block_until_ready(out)

    ref = reference_forward(x, params)
    assert out.shape == (N, out_channels, H, W), out.shape
    assert jnp.allclose(out, ref, atol=1e-5, rtol=1e-5), (
        "mismatch vs reference, max abs err = %g" % float(jnp.max(jnp.abs(out - ref)))
    )

    print("KERNEL_OK")
</pallas_src>

<mosaic_0001>
module attributes {stable_mosaic.version = 11 : i64} {
  func.func @_inverted_residual_kernel(%arg0: i32, %arg1: i32, %arg2: memref<1x4x256xf32, #tpu.memory_space<vmem>>, %arg3: memref<32x4xf32, #tpu.memory_space<vmem>>, %arg4: memref<32x1xf32, #tpu.memory_space<vmem>>, %arg5: memref<3x32xf32, #tpu.memory_space<vmem>>, %arg6: memref<3x1xf32, #tpu.memory_space<vmem>>, %arg7: memref<1x3x256xf32, #tpu.memory_space<vmem>>) attributes {dimension_semantics = [#tpu.dimension_semantics<parallel>, #tpu.dimension_semantics<parallel>], iteration_bounds = array<i64: 2, 1>, scalar_prefetch = 0 : i64, scratch_operands = 0 : i64, tpu.core_type = #tpu.core_type<tc>, window_params = [{transform_indices = @transform_0, window_bounds = array<i64: 1, 4, 256>}, {pipeline_mode = #tpu.pipeline_mode<synchronous>, transform_indices = @transform_1, window_bounds = array<i64: 32, 4>}, {pipeline_mode = #tpu.pipeline_mode<synchronous>, transform_indices = @transform_2, window_bounds = array<i64: 32, 1>}, {pipeline_mode = #tpu.pipeline_mode<synchronous>, transform_indices = @transform_3, window_bounds = array<i64: 3, 32>}, {pipeline_mode = #tpu.pipeline_mode<synchronous>, transform_indices = @transform_4, window_bounds = array<i64: 3, 1>}, {transform_indices = @transform_5, window_bounds = array<i64: 1, 3, 256>}]} {
    %c0 = arith.constant 0 : index
    %c0_0 = arith.constant 0 : index
    %c0_1 = arith.constant 0 : index
    %0 = vector.load %arg2[%c0, %c0_0, %c0_1] : memref<1x4x256xf32, #tpu.memory_space<vmem>>, vector<1x4x256xf32>
    %1 = vector.shape_cast %0 : vector<1x4x256xf32> to vector<4x256xf32>
    %c0_2 = arith.constant 0 : index
    %c0_3 = arith.constant 0 : index
    %2 = vector.load %arg3[%c0_2, %c0_3] : memref<32x4xf32, #tpu.memory_space<vmem>>, vector<32x4xf32>
    %cst = arith.constant dense<0.000000e+00> : vector<32x256xf32>
    %3 = tpu.matmul %2, %1, %cst {dimension_numbers = #tpu.dot_dimension_numbers<[1], [0], [0], [1], [0, 0, 1, 1], [], []>} : vector<32x4xf32>, vector<4x256xf32>, vector<32x256xf32> -> vector<32x256xf32>
    %c0_4 = arith.constant 0 : index
    %c0_5 = arith.constant 0 : index
    %4 = vector.load %arg4[%c0_4, %c0_5] : memref<32x1xf32, #tpu.memory_space<vmem>>, vector<32x1xf32>
    %5 = vector.broadcast %4 : vector<32x1xf32> to vector<32x256xf32>
    %6 = arith.addf %3, %5 : vector<32x256xf32>
    %cst_6 = arith.constant 0.000000e+00 : f32
    %cst_7 = arith.constant 6.000000e+00 : f32
    %7 = vector.broadcast %cst_6 : f32 to vector<32x256xf32>
    %8 = arith.maximumf %7, %6 : vector<32x256xf32>
    %9 = vector.broadcast %cst_7 : f32 to vector<32x256xf32>
    %10 = arith.minimumf %9, %8 : vector<32x256xf32>
    %c0_8 = arith.constant 0 : index
    %c0_9 = arith.constant 0 : index
    %11 = vector.load %arg5[%c0_8, %c0_9] : memref<3x32xf32, #tpu.memory_space<vmem>>, vector<3x32xf32>
    %cst_10 = arith.constant dense<0.000000e+00> : vector<3x256xf32>
    %12 = tpu.matmul %11, %10, %cst_10 {dimension_numbers = #tpu.dot_dimension_numbers<[1], [0], [0], [1], [0, 0, 1, 1], [], []>} : vector<3x32xf32>, vector<32x256xf32>, vector<3x256xf32> -> vector<3x256xf32>
    %c0_11 = arith.constant 0 : index
    %c0_12 = arith.constant 0 : index
    %13 = vector.load %arg6[%c0_11, %c0_12] : memref<3x1xf32, #tpu.memory_space<vmem>>, vector<3x1xf32>
    %14 = vector.broadcast %13 : vector<3x1xf32> to vector<3x256xf32>
    %15 = arith.addf %12, %14 : vector<3x256xf32>
    %cst_13 = arith.constant 0.000000e+00 : f32
    %16 = vector.broadcast %cst_13 : f32 to vector<3x256xf32>
    %17 = arith.maximumf %15, %16 : vector<3x256xf32>
    %c0_14 = arith.constant 0 : index
    %c0_15 = arith.constant 0 : index
    %c0_16 = arith.constant 0 : index
    %18 = vector.load %arg7[%c0_14, %c0_15, %c0_16] : memref<1x3x256xf32, #tpu.memory_space<vmem>>, vector<1x3x256xf32>
    %19 = vector.shape_cast %18 : vector<1x3x256xf32> to vector<3x256xf32>
    %20 = vector.shape_cast %17 : vector<3x256xf32> to vector<1x3x256xf32>
    tpu.vector_store %arg7[%c0_14, %c0_15, %c0_16], %20 {strides = array<i32>} : memref<1x3x256xf32, #tpu.memory_space<vmem>>, vector<1x3x256xf32>,
    return
  }
  func.func @transform_0(%arg0: i32, %arg1: i32) -> (i32, i32, i32) {
    %c0_i32 = arith.constant 0 : i32
    %c0_i32_0 = arith.constant 0 : i32
    return %arg0, %c0_i32, %arg1 : i32, i32, i32
  }
  func.func @transform_1(%arg0: i32, %arg1: i32) -> (i32, i32) {
    %c0_i32 = arith.constant 0 : i32
    %c0_i32_0 = arith.constant 0 : i32
    %c0_i32_1 = arith.constant 0 : i32
    return %c0_i32, %c0_i32_0 : i32, i32
  }
  func.func @transform_2(%arg0: i32, %arg1: i32) -> (i32, i32) {
    %c0_i32 = arith.constant 0 : i32
    %c0_i32_0 = arith.constant 0 : i32
    %c0_i32_1 = arith.constant 0 : i32
    return %c0_i32, %c0_i32_0 : i32, i32
  }
  func.func @transform_3(%arg0: i32, %arg1: i32) -> (i32, i32) {
    %c0_i32 = arith.constant 0 : i32
    %c0_i32_0 = arith.constant 0 : i32
    %c0_i32_1 = arith.constant 0 : i32
    return %c0_i32, %c0_i32_0 : i32, i32
  }
  func.func @transform_4(%arg0: i32, %arg1: i32) -> (i32, i32) {
    %c0_i32 = arith.constant 0 : i32
    %c0_i32_0 = arith.constant 0 : i32
    %c0_i32_1 = arith.constant 0 : i32
    return %c0_i32, %c0_i32_0 : i32, i32
  }
  func.func @transform_5(%arg0: i32, %arg1: i32) -> (i32, i32, i32) {
    %c0_i32 = arith.constant 0 : i32
    %c0_i32_0 = arith.constant 0 : i32
    return %arg0, %c0_i32, %arg1 : i32, i32, i32
  }
}

</mosaic_0001>

<llo_original>
// kernel: inverted_residual_forward.1
$region0: #{inverted_residual_forward.1}
  #allocation0 [shape = 'u32[]', space=smem, size = 0x4, offset = 0x4, fixed_abs, tag = 'smem constant byte address 0x4 - core index']
  #allocation1 [shape = 'u32[72,128]{1,0:T(1,128)}', space=vmem, size = 0x9000, scoped, tag = 'internal scratch']
  %s0 = inlined_call_operand.vmem [shape: f32[2,4,256], index: 0, kind: input, shape index: {}]
  %s1 = inlined_call_operand.vmem [shape: f32[32,4], index: 1, kind: input, shape index: {}]
  %s2 = inlined_call_operand.vmem [shape: f32[32,1], index: 2, kind: input, shape index: {}]
  %s3 = inlined_call_operand.vmem [shape: f32[3,32], index: 3, kind: input, shape index: {}]
  %s4 = inlined_call_operand.vmem [shape: f32[3,1], index: 4, kind: input, shape index: {}]
  %s5 = inlined_call_operand.vmem [shape: f32[2,3,256], index: 5, kind: output, shape index: {}]
  %s6 = sld [smem:[#allocation0]]
  $region53: #{inverted_residual_forward.1} parent=0
    _
  %s8 = ssub.s32 1, %s6
  %s9 = scalar_select 0, %s8, %s6
  loop: start=0, step=1, limit=4
  $region2: #{inverted_residual_forward.1} parent=0 // loop_pre_header
    _
  $region3: #{inverted_residual_forward.1} parent=0 // loop_header
    %s11 = sphi 0, %s15
    %p12 = scmp.ge.s32.totalorder %s11, 4
    %s18 = sphi 0, %s30
    %s19 = sphi 0, %s26
    %s20 = sphi 0, %s18
    %s21 = sphi 0, %s19
    %s22 = sphi 0, %s20
    %s23 = sphi 0, %s21
    %s35 = sphi 0, %s37
    %s38 = sphi 0, %s35
    %s39 = sphi 0, %s38
    %s55 = sphi 0, %s39
    %s59 = sphi 0, %s59
    %s61 = sphi 0, %s59
    %s62 = sphi 0, %s61
    %s76 = sphi 0, %s62
    %s80 = sphi 0, %s80
    %s82 = sphi 0, %s80
    %s83 = sphi 0, %s82
    %s97 = sphi 0, %s83
    %s101 = sphi 0, %s101
    %s103 = sphi 0, %s101
    %s104 = sphi 0, %s103
    %s118 = sphi 0, %s104
    %s122 = sphi 0, %s122
    %s124 = sphi 0, %s122
    %s125 = sphi 0, %s124
    %s139 = sphi 0, %s125
    %s147 = sphi 0, %s149
    %s150 = sphi 0, %s147
    %s151 = sphi 0, %s150
    %s167 = sphi 0, %s151
  $region4: #{inverted_residual_forward.1} parent=0 // loop_header_branch
    %14 = sbr.rel (%p12) target = $region8
  $region5: #{inverted_residual_forward.1} parent=0 // loop_body
    %s16 = ssub.s32 %s11, 1
    %s17 = ssub.s32 %s11, 2
    %s24 = sadd.s32 1, %s19
    %p25 = scmp.ge.s32.totalorder %s24, 1
    %s26 = scalar_select %p25, 0, %s24
    %s27 = sadd.s32 1, %s18
    %s28 = scalar_select %p25, %s27, %s18
    %p29 = scmp.ge.s32.totalorder %s28, 2
    %s30 = scalar_select %p29, 0, %s28
    %s31 = ssub.s32 %s18, %s30
    %s32 = ssub.s32 %s19, %s26
    %s33 = sor.u32 %s31, %s32
    %p34 = scmp.eq.s32.totalorder %s33, 0
    %s36 = sadd.s32 %s35, 1
    %s37 = scalar_select %p34, %s35, %s36
    %p40 = pneg %p34
    %p41 = scmp.eq.s32.totalorder %s11, 1
    %p42 = por %p40, %p41
    %p43 = scmp.ne.s32.totalorder %s35, %s38
    %p44 = scmp.eq.s32.totalorder %s11, 0
    %p45 = por %p43, %p44
    %p46 = scmp.ne.s32.totalorder %s35, %s38
    %p47 = scmp.eq.s32.totalorder %s16, 1
    %p48 = por %p46, %p47
    %p49 = scmp.ne.s32.totalorder %s38, %s39
    %p50 = scmp.eq.s32.totalorder %s16, 0
    %p51 = por %p49, %p50
    %p52 = scmp.ne.s32.totalorder %s38, %s39
    %p53 = scmp.eq.s32.totalorder %s17, 1
    %p54 = por %p52, %p53
    %p56 = scmp.ne.s32.totalorder %s39, %s55
    %p57 = scmp.eq.s32.totalorder %s17, 0
    %p58 = por %p56, %p57
    %s60 = sadd.s32 %s59, 1
    %p63 = scmp.eq.s32.totalorder %s11, 1
    %p64 = scmp.ne.s32.totalorder %s59, %s61
    %p65 = scmp.eq.s32.totalorder %s11, 0
    %p66 = por %p64, %p65
    %p67 = scmp.ne.s32.totalorder %s59, %s61
    %p68 = scmp.eq.s32.totalorder %s16, 1
    %p69 = por %p67, %p68
    %p70 = scmp.ne.s32.totalorder %s61, %s62
    %p71 = scmp.eq.s32.totalorder %s16, 0
    %p72 = por %p70, %p71
    %p73 = scmp.ne.s32.totalorder %s61, %s62
    %p74 = scmp.eq.s32.totalorder %s17, 1
    %p75 = por %p73, %p74
    %p77 = scmp.ne.s32.totalorder %s62, %s76
    %p78 = scmp.eq.s32.totalorder %s17, 0
    %p79 = por %p77, %p78
    %s81 = sadd.s32 %s80, 1
    %p84 = scmp.eq.s32.totalorder %s11, 1
    %p85 = scmp.ne.s32.totalorder %s80, %s82
    %p86 = scmp.eq.s32.totalorder %s11, 0
    %p87 = por %p85, %p86
    %p88 = scmp.ne.s32.totalorder %s80, %s82
    %p89 = scmp.eq.s32.totalorder %s16, 1
    %p90 = por %p88, %p89
    %p91 = scmp.ne.s32.totalorder %s82, %s83
    %p92 = scmp.eq.s32.totalorder %s16, 0
    %p93 = por %p91, %p92
    %p94 = scmp.ne.s32.totalorder %s82, %s83
    %p95 = scmp.eq.s32.totalorder %s17, 1
    %p96 = por %p94, %p95
    %p98 = scmp.ne.s32.totalorder %s83, %s97
    %p99 = scmp.eq.s32.totalorder %s17, 0
    %p100 = por %p98, %p99
    %s102 = sadd.s32 %s101, 1
    %p105 = scmp.eq.s32.totalorder %s11, 1
    %p106 = scmp.ne.s32.totalorder %s101, %s103
    %p107 = scmp.eq.s32.totalorder %s11, 0
    %p108 = por %p106, %p107
    %p109 = scmp.ne.s32.totalorder %s101, %s103
    %p110 = scmp.eq.s32.totalorder %s16, 1
    %p111 = por %p109, %p110
    %p112 = scmp.ne.s32.totalorder %s103, %s104
    %p113 = scmp.eq.s32.totalorder %s16, 0
    %p114 = por %p112, %p113
    %p115 = scmp.ne.s32.totalorder %s103, %s104
    %p116 = scmp.eq.s32.totalorder %s17, 1
    %p117 = por %p115, %p116
    %p119 = scmp.ne.s32.totalorder %s104, %s118
    %p120 = scmp.eq.s32.totalorder %s17, 0
    %p121 = por %p119, %p120
    %s123 = sadd.s32 %s122, 1
    %p126 = scmp.eq.s32.totalorder %s11, 1
    %p127 = scmp.ne.s32.totalorder %s122, %s124
    %p128 = scmp.eq.s32.totalorder %s11, 0
    %p129 = por %p127, %p128
    %p130 = scmp.ne.s32.totalorder %s122, %s124
    %p131 = scmp.eq.s32.totalorder %s16, 1
    %p132 = por %p130, %p131
    %p133 = scmp.ne.s32.totalorder %s124, %s125
    %p134 = scmp.eq.s32.totalorder %s16, 0
    %p135 = por %p133, %p134
    %p136 = scmp.ne.s32.totalorder %s124, %s125
    %p137 = scmp.eq.s32.totalorder %s17, 1
    %p138 = por %p136, %p137
    %p140 = scmp.ne.s32.totalorder %s125, %s139
    %p141 = scmp.eq.s32.totalorder %s17, 0
    %p142 = por %p140, %p141
    %s143 = ssub.s32 %s18, %s30
    %s144 = ssub.s32 %s19, %s26
    %s145 = sor.u32 %s143, %s144
    %p146 = scmp.eq.s32.totalorder %s145, 0
    %s148 = sadd.s32 %s147, 1
    %s149 = scalar_select %p146, %s147, %s148
    %p152 = pneg %p146
    %p153 = scmp.eq.s32.totalorder %s11, 1
    %p154 = por %p152, %p153
    %p155 = scmp.ne.s32.totalorder %s147, %s150
    %p156 = scmp.eq.s32.totalorder %s11, 0
    %p157 = por %p155, %p156
    %p158 = scmp.ne.s32.totalorder %s147, %s150
    %p159 = scmp.eq.s32.totalorder %s16, 1
    %p160 = por %p158, %p159
    %p161 = scmp.ne.s32.totalorder %s150, %s151
    %p162 = scmp.eq.s32.totalorder %s16, 0
    %p163 = por %p161, %p162
    %p164 = scmp.ne.s32.totalorder %s150, %s151
    %p165 = scmp.eq.s32.totalorder %s17, 1
    %p166 = por %p164, %p165
    %p168 = scmp.ne.s32.totalorder %s151, %s167
    %p169 = scmp.eq.s32.totalorder %s17, 0
    %p170 = por %p168, %p169
    %p171 = scmp.le.s32.totalorder 1, %s11
    %p172 = scmp.lt.s32.totalorder %s11, 3
    %p173 = pnand %p171, %p172
    %p174 = pneg %p173
    // Predicated region
    $region9: #{inverted_residual_forward.1} parent=5 // pred_check
      _
    $region10: #{inverted_residual_forward.1} parent=5 // pred_check_branch
      %176 = sbr.rel (%p173) target = $region12
    $region11: #{inverted_residual_forward.1} parent=5 // pred_region
      %s177 = ssub.s32 %s11, 1
      // Predicated region
      $region13: #{inverted_residual_forward.1} parent=11 // pred_check
        %p178 = pneg %p72
      $region14: #{inverted_residual_forward.1} parent=11 // pred_check_branch
        %180 = sbr.rel (%p178) target = $region16
      $region15: #{inverted_residual_forward.1} parent=11 // pred_region
        _
      $region16: #{inverted_residual_forward.1} parent=11 // pred_fallthru
        _
      // Predicated region
      $region17: #{inverted_residual_forward.1} parent=11 // pred_check
        %p181 = pneg %p93
      $region18: #{inverted_residual_forward.1} parent=11 // pred_check_branch
        %183 = sbr.rel (%p181) target = $region20
      $region19: #{inverted_residual_forward.1} parent=11 // pred_region
        _
      $region20: #{inverted_residual_forward.1} parent=11 // pred_fallthru
        _
      // Predicated region
      $region21: #{inverted_residual_forward.1} parent=11 // pred_check
        %p184 = pneg %p114
      $region22: #{inverted_residual_forward.1} parent=11 // pred_check_branch
        %186 = sbr.rel (%p184) target = $region24
      $region23: #{inverted_residual_forward.1} parent=11 // pred_region
        _
      $region24: #{inverted_residual_forward.1} parent=11 // pred_fallthru
        _
      // Predicated region
      $region25: #{inverted_residual_forward.1} parent=11 // pred_check
        %p187 = pneg %p135
      $region26: #{inverted_residual_forward.1} parent=11 // pred_check_branch
        %189 = sbr.rel (%p187) target = $region28
      $region27: #{inverted_residual_forward.1} parent=11 // pred_region
        _
      $region28: #{inverted_residual_forward.1} parent=11 // pred_fallthru
        _
    $region12: #{inverted_residual_forward.1} parent=5 // pred_fallthru
      _
    %p190 = scmp.lt.s32.totalorder %s11, 2
    // Predicated region
    $region29: #{inverted_residual_forward.1} parent=5 // pred_check
      %p191 = pneg %p190
    $region30: #{inverted_residual_forward.1} parent=5 // pred_check_branch
      %193 = sbr.rel (%p191) target = $region32
    $region31: #{inverted_residual_forward.1} parent=5 // pred_region
      // Predicated region
      $region33: #{inverted_residual_forward.1} parent=31 // pred_check
        %p194 = pneg %p45
      $region34: #{inverted_residual_forward.1} parent=31 // pred_check_branch
        %196 = sbr.rel (%p194) target = $region36
      $region35: #{inverted_residual_forward.1} parent=31 // pred_region
        %s197 = smul.u32 2, %s19
        %p198 = scmp.lt.s32.totalorder %s18, 1
        %s199 = scalar_select %p198, %s18, 1
        %p200 = scmp.lt.s32.totalorder %s197, 1
        %s201 = scalar_select %p200, %s197, 1
        %s202 = smul.addr %s199, 2
        %s203 = sadd.s32 %s201, %s202
        %s204 = smul.addr %s203, 4
        %s205 = scalar_lea.vmem %s0, %s204
        %s206 = smul.u32 2, %s19
      $region36: #{inverted_residual_forward.1} parent=31 // pred_fallthru
        _
    $region32: #{inverted_residual_forward.1} parent=5 // pred_fallthru
      _
    %p207 = scmp.le.s32.totalorder 1, %s11
    %p208 = scmp.lt.s32.totalorder %s11, 3
    %p209 = pnand %p207, %p208
    %p210 = pneg %p209
    // Predicated region
    $region37: #{inverted_residual_forward.1} parent=5 // pred_check
      _
    $region38: #{inverted_residual_forward.1} parent=5 // pred_check_branch
      %212 = sbr.rel (%p209) target = $region40
    $region39: #{inverted_residual_forward.1} parent=5 // pred_region
      %s213 = ssub.s32 %s11, 1
      %s214 = smul.u32 2, %s21
      %p215 = scmp.lt.s32.totalorder %s20, 1
      %s216 = scalar_select %p215, %s20, 1
      %p217 = scmp.lt.s32.totalorder %s214, 1
      %s218 = scalar_select %p217, %s214, 1
      %s219 = smul.addr %s216, 2
      %s220 = sadd.s32 %s218, %s219
      %s221 = smul.addr %s220, 4
      %s222 = scalar_lea.vmem %s0, %s221
      %p223 = pneg %p51
      %p224 = pneg %p48
      %p225 = pneg %p72
      %p226 = pneg %p69
      %p227 = pneg %p93
      %p228 = pneg %p90
      %p229 = pneg %p114
      %p230 = pneg %p111
      %p231 = pneg %p135
      %p232 = pneg %p132
      %p233 = pneg %p163
      %p234 = pneg %p160
      %s235 = smul.u32 2, %s21
      %p236 = scmp.lt.s32.totalorder %s20, 1
      %s237 = scalar_select %p236, %s20, 1
      %p238 = scmp.lt.s32.totalorder %s235, 1
      %s239 = scalar_select %p238, %s235, 1
      %s240 = smul.addr %s237, 2
      %s241 = sadd.s32 %s239, %s240
      %s242 = smul.addr %s241, 4
      %s243 = scalar_lea.vmem %s5, %s242
      %s244 = smul.u32 2, %s21
      %p245 = scmp.lt.s32.totalorder %s20, 1
      %s246 = scalar_select %p245, %s20, 1
      %p247 = scmp.lt.s32.totalorder %s244, 1
      %s248 = scalar_select %p247, %s244, 1
      %s249 = smul.addr %s246, 2
      %s250 = sadd.s32 %s248, %s249
      %s251 = smul.addr %s250, 4
      %s252 = scalar_lea.vmem %s0, %s251
      %s253 = smul.u32 2, %s21
      %s254 = smul.u32 2, %s21
      %p255 = scmp.lt.s32.totalorder %s20, 1
      %s256 = scalar_select %p255, %s20, 1
      %p257 = scmp.lt.s32.totalorder %s254, 1
      %s258 = scalar_select %p257, %s254, 1
      %s259 = smul.addr %s256, 2
      %s260 = sadd.s32 %s258, %s259
      %s261 = smul.addr %s260, 4
      %s262 = scalar_lea.vmem %s5, %s261
      %s263 = smul.u32 2, %s21
      %v264 = vld [vmem:[%s252] sm:$0xff]
      %v265 = vld [vmem:[%s1] sm:$0xff]
      %v266 = vld [vmem:[%s1 + $0x8] sm:$0xff]
      %v267 = vld [vmem:[%s1 + $0x10] sm:$0xff]
      %v268 = vld [vmem:[%s1 + $0x18] sm:$0xff]
      %v269 = vld [vmem:[%s2] sm:$0xff]
      %v270 = vld [vmem:[%s2 + $0x8] sm:$0xff]
      %v271 = vld [vmem:[%s2 + $0x10] sm:$0xff]
      %v272 = vld [vmem:[%s2 + $0x18] sm:$0xff]
      %274 = vset.pattern.permute.xlu0 0
      %275 = vperm.xlu0 %274, %v269
      %v276 = vpop.permute.xlu0 %275
      %279 = vset.pattern.permute.xlu0 0
      %280 = vperm.xlu0 %279, %v270
      %v281 = vpop.permute.xlu0 %280
      %284 = vset.pattern.permute.xlu0 0
      %285 = vperm.xlu0 %284, %v271
      %v286 = vpop.permute.xlu0 %285
      %289 = vset.pattern.permute.xlu0 0
      %290 = vperm.xlu0 %289, %v272
      %v291 = vpop.permute.xlu0 %290
      %294 = vst [vmem:[#allocation1] ss:$2 sm:$0xff] %v264
      %v295 = vld.sshfl [vmem:[#allocation1] sm:$0xff pattern:$0x75316420]
      %v296 = vld.sshfl [vmem:[#allocation1 + $0x8] sm:$0xff pattern:$0x75316420]
      %vm297 = vcmask 31744
      %v299 = vsel %vm297, %v265, 0
      %v302 = vsel %vm297, %v266, 0
      %v305 = vsel %vm297, %v267, 0
      %v308 = vsel %vm297, %v268, 0
      %vm310 = vcmask 1043456
      %v311 = vsel %vm310, %v295, 0
      %v313 = vsel %vm310, %v296, 0
      %315 = vmatpush.msra.mxu0 0.0
      %316 = vmatpush.msra.mxu0 0.0
      %317 = vmatpush.msra.mxu0 0.0
      %318 = vmatpush.msra.mxu0 0.0
      %319 = vmatpush.msra.mxu0 0.0
      %320 = vmatpush.msra.mxu0 0.0
      %321 = vmatpush.msra.mxu0 0.0
      %322 = vmatpush.msra.mxu0 0.0
      %323 = vmatpush.msra.mxu0 0.0
      %324 = vmatpush.msra.mxu0 0.0
      %325 = vmatpush.msra.mxu0 0.0
      %326 = vmatpush.msra.mxu0 0.0
      %327 = vmatpush.msra.mxu0 0.0
      %328 = vmatpush.msra.mxu0 0.0
      %329 = vmatpush.msra.mxu0 0.0
      %330 = vmatpush.msra.mxu0 %v311
      %331 = vmatmul.f32.gmra.mxu0 %v299
      %v332 = vpop.f32.mrf.mxu0
      %v333 = vadd.f32 %v276, %v332
      %334 = vmatmul.f32.gmra.mxu0 %v302
      %v335 = vpop.f32.mrf.mxu0
      %v336 = vadd.f32 %v281, %v335
      %337 = vmatmul.f32.gmra.mxu0 %v305
      %v338 = vpop.f32.mrf.mxu0
      %v339 = vadd.f32 %v286, %v338
      %340 = vmatmul.f32.gmra.mxu0 %v308
      %v341 = vpop.f32.mrf.mxu0
      %v342 = vadd.f32 %v291, %v341
      %343 = vdwg.mxu0
      %344 = vmatpush.msra.mxu0 0.0
      %345 = vmatpush.msra.mxu0 0.0
      %346 = vmatpush.msra.mxu0 0.0
      %347 = vmatpush.msra.mxu0 0.0
      %348 = vmatpush.msra.mxu0 0.0
      %349 = vmatpush.msra.mxu0 0.0
      %350 = vmatpush.msra.mxu0 0.0
      %351 = vmatpush.msra.mxu0 0.0
      %352 = vmatpush.msra.mxu0 0.0
      %353 = vmatpush.msra.mxu0 0.0
      %354 = vmatpush.msra.mxu0 0.0
      %355 = vmatpush.msra.mxu0 0.0
      %356 = vmatpush.msra.mxu0 0.0
      %357 = vmatpush.msra.mxu0 0.0
      %358 = vmatpush.msra.mxu0 0.0
      %359 = vmatpush.msra.mxu0 %v313
      %360 = vmatmul.f32.gmra.mxu0 %v299
      %v361 = vpop.f32.mrf.mxu0
      %v362 = vadd.f32 %v276, %v361
      %363 = vmatmul.f32.gmra.mxu0 %v302
      %v364 = vpop.f32.mrf.mxu0
      %v365 = vadd.f32 %v281, %v364
      %366 = vmatmul.f32.gmra.mxu0 %v305
      %v367 = vpop.f32.mrf.mxu0
      %v368 = vadd.f32 %v286, %v367
      %369 = vmatmul.f32.gmra.mxu0 %v308
      %v370 = vpop.f32.mrf.mxu0
      %v371 = vadd.f32 %v291, %v370
      %372 = vdwg.mxu0
      %v373 = vmax.f32 %v333, 0.0
      %v374 = vmax.f32 %v362, 0.0
      %v375 = vmax.f32 %v336, 0.0
      %v376 = vmax.f32 %v365, 0.0
      %v377 = vmax.f32 %v339, 0.0
      %v378 = vmax.f32 %v368, 0.0
      %v379 = vmax.f32 %v342, 0.0
      %v380 = vmax.f32 %v371, 0.0
      %v381 = vmin.f32 %v373, 6.0
      %v382 = vmin.f32 %v374, 6.0
      %v383 = vmin.f32 %v375, 6.0
      %v384 = vmin.f32 %v376, 6.0
      %v385 = vmin.f32 %v377, 6.0
      %v386 = vmin.f32 %v378, 6.0
      %v387 = vmin.f32 %v379, 6.0
      %v388 = vmin.f32 %v380, 6.0
      %v389 = vld [vmem:[%s3] sm:$0x7]
      %v390 = vld [vmem:[%s4] sm:$0x7]
      %392 = vset.pattern.permute.xlu0 0
      %393 = vperm.xlu0 %392, %v390
      %v394 = vpop.permute.xlu0 %393
      %vm396 = vcmask 261120
      %v398 = vsel %vm396, %v389, 0
      %400 = vmatpush.msra.mxu0 0.0
      %401 = vmatpush.msra.mxu0 0.0
      %402 = vmatpush.msra.mxu0 0.0
      %403 = vmatpush.msra.mxu0 0.0
      %404 = vmatpush.msra.mxu0 0.0
      %405 = vmatpush.msra.mxu0 0.0
      %406 = vmatpush.msra.mxu0 0.0
      %407 = vmatpush.msra.mxu0 0.0
      %408 = vmatpush.msra.mxu0 0.0
      %409 = vmatpush.msra.mxu0 0.0
      %410 = vmatpush.msra.mxu0 0.0
      %411 = vmatpush.msra.mxu0 0.0
      %412 = vmatpush.msra.mxu0 %v387
      %413 = vmatpush.msra.mxu0 %v385
      %414 = vmatpush.msra.mxu0 %v383
      %415 = vmatpush.msra.mxu0 %v381
      %416 = vmatmul.f32.gmra.mxu0 %v398
      %v417 = vpop.f32.mrf.mxu0
      %v418 = vadd.f32 %v394, %v417
      %419 = vdwg.mxu0
      %420 = vmatpush.msra.mxu0 0.0
      %421 = vmatpush.msra.mxu0 0.0
      %422 = vmatpush.msra.mxu0 0.0
      %423 = vmatpush.msra.mxu0 0.0
      %424 = vmatpush.msra.mxu0 0.0
      %425 = vmatpush.msra.mxu0 0.0
      %426 = vmatpush.msra.mxu0 0.0
      %427 = vmatpush.msra.mxu0 0.0
      %428 = vmatpush.msra.mxu0 0.0
      %429 = vmatpush.msra.mxu0 0.0
      %430 = vmatpush.msra.mxu0 0.0
      %431 = vmatpush.msra.mxu0 0.0
      %432 = vmatpush.msra.mxu0 %v388
      %433 = vmatpush.msra.mxu0 %v386
      %434 = vmatpush.msra.mxu0 %v384
      %435 = vmatpush.msra.mxu0 %v382
      %436 = vmatmul.f32.gmra.mxu0 %v398
      %v437 = vpop.f32.mrf.mxu0
      %v438 = vadd.f32 %v394, %v437
      %439 = vdwg.mxu0
      %v440 = vmax.f32 %v418, 0.0
      %v441 = vmax.f32 %v438, 0.0
      %v444 = vrot.slane %v441, 4
      %v445 = vsel %vm310, %v440, %v444
      %447 = vst [vmem:[%s262] sm:$0x77] %v445
      %s448 = smul.u32 2, %s21
      %p449 = scmp.lt.s32.totalorder %s20, 1
      %s450 = scalar_select %p449, %s20, 1
      %p451 = scmp.lt.s32.totalorder %s448, 1
      %s452 = scalar_select %p451, %s448, 1
      %s453 = smul.addr %s450, 2
      %s454 = sadd.s32 %s452, %s453
      %s455 = smul.addr %s454, 4
      %s456 = scalar_lea.vmem %s5, %s455
      // Predicated region
      $region41: #{inverted_residual_forward.1} parent=39 // pred_check
        %p457 = pneg %p160
      $region42: #{inverted_residual_forward.1} parent=39 // pred_check_branch
        %459 = sbr.rel (%p457) target = $region44
      $region43: #{inverted_residual_forward.1} parent=39 // pred_region
        %s460 = smul.u32 2, %s21
      $region44: #{inverted_residual_forward.1} parent=39 // pred_fallthru
        _
    $region40: #{inverted_residual_forward.1} parent=5 // pred_fallthru
      _
    %p461 = scmp.le.s32.totalorder 2, %s11
    // Predicated region
    $region45: #{inverted_residual_forward.1} parent=5 // pred_check
      %p462 = pneg %p461
    $region46: #{inverted_residual_forward.1} parent=5 // pred_check_branch
      %464 = sbr.rel (%p462) target = $region48
    $region47: #{inverted_residual_forward.1} parent=5 // pred_region
      %s465 = ssub.s32 %s11, 2
      // Predicated region
      $region49: #{inverted_residual_forward.1} parent=47 // pred_check
        %p466 = pneg %p166
      $region50: #{inverted_residual_forward.1} parent=47 // pred_check_branch
        %468 = sbr.rel (%p466) target = $region52
      $region51: #{inverted_residual_forward.1} parent=47 // pred_region
        %s469 = smul.u32 2, %s23
        %p470 = scmp.lt.s32.totalorder %s22, 1
        %s471 = scalar_select %p470, %s22, 1
        %p472 = scmp.lt.s32.totalorder %s469, 1
        %s473 = scalar_select %p472, %s469, 1
        %s474 = smul.addr %s471, 2
        %s475 = sadd.s32 %s473, %s474
        %s476 = smul.addr %s475, 4
        %s477 = scalar_lea.vmem %s5, %s476
      $region52: #{inverted_residual_forward.1} parent=47 // pred_fallthru
        _
    $region48: #{inverted_residual_forward.1} parent=5 // pred_fallthru
      _
  $region6: #{inverted_residual_forward.1} parent=0 // loop_footer
    %s15 = sadd.s32 1, %s11
  $region7: #{inverted_residual_forward.1} parent=0 // loop_footer_branch
    %10 = sbr.rel target = $region3
  $region8: #{inverted_residual_forward.1} parent=0 // loop_exit
    _

</llo_original>
